<compile_context>
chip_gen: v5e
topology: v5e:2x2
jax: 0.10.0
libtpu: 0.0.40
codegen_flags: <defaults>
</compile_context>

<pallas_src>
import functools

import jax
import jax.numpy as jnp
from jax import lax
from jax.experimental import pallas as pl
from jax.experimental.pallas import tpu as pltpu

EPS = 1e-5


def _round_up(v, m):
    return (v + m - 1) // m * m


def _multi_task_head_kernel(x_ref, mask_ref, w1_ref, sc_ref, sh_ref,
                            w2_ref, b2_ref, o_ref, *, H, W):
    """Fused MultiTaskHead for one batch element, channel-major layout.

    x_ref   : (1, Cp, H*W)   input; channels on sublanes, flat spatial on lanes
    mask_ref: (9, H*W)       0/1 border-validity mask per 3x3 tap
    w1_ref  : (Mp, 9*Cp)     packed conv1 weights (all heads), im2col layout
    sc_ref  : (Mp, 1)        folded BN scale  = gamma / sqrt(var + eps)
    sh_ref  : (Mp, 1)        folded BN shift  = beta - mean*scale + b1*scale
    w2_ref  : (Op, 9*Mp)     block-diagonal packed conv2 weights
    b2_ref  : (Op, 1)        packed conv2 bias
    o_ref   : (1, Otot, H*W) concatenated output (== flattened NCHW)
    """
    HW = H * W
    masks = mask_ref[...]                                       # (9, HW)

    def im2col(v):
        # v: (K, HW) -> (9*K, HW); row index = tap*K + k, tap = ky*3 + kx.
        pieces = []
        for ky in range(3):
            for kx in range(3):
                off = (ky - 1) * W + (kx - 1)
                s = v if off == 0 else pltpu.roll(v, shift=(-off) % HW, axis=1)
                if not (ky == 1 and kx == 1):
                    tap = ky * 3 + kx
                    s = s * masks[tap:tap + 1, :]               # zero the halo
                pieces.append(s)
        return jnp.concatenate(pieces, axis=0)

    x = x_ref[0]                                                # (Cp, HW)

    # conv1 for all heads: one MXU matmul, K = 9*Cp.
    h = jnp.dot(w1_ref[...], im2col(x), preferred_element_type=jnp.float32)
    # folded BatchNorm(eval) + conv1 bias + ReLU.
    h = jnp.maximum(h * sc_ref[...] + sh_ref[...], 0.0)         # (Mp, HW)

    # conv2 (block-diagonal over heads): one MXU matmul, K = 9*Mp.
    y = jnp.dot(w2_ref[...], im2col(h), preferred_element_type=jnp.float32)
    y = y + b2_ref[...]                                         # (Op, HW)
    o_ref[0] = y[:o_ref.shape[1], :].astype(o_ref.dtype)


def _pack_heads(heads_params, C, H, W):
    """Pack all heads into fused, sublane-aligned, kernel-friendly matrices."""
    Cp = _round_up(C, 8)
    Ms = [int(p['w1_oihw'].shape[0]) for p in heads_params]
    Os = [int(p['w2_oihw'].shape[0]) for p in heads_params]
    Mtot, Otot = sum(Ms), sum(Os)
    Mp = _round_up(Mtot, 8)
    Op = _round_up(Otot, 8)

    w1 = jnp.zeros((Mp, 3, 3, Cp), jnp.float32)       # [m, ky, kx, c]
    scale = jnp.zeros((Mp,), jnp.float32)
    shift = jnp.zeros((Mp,), jnp.float32)
    w2 = jnp.zeros((Op, 3, 3, Mp), jnp.float32)       # [o, ky, kx, m]
    b2 = jnp.zeros((Op,), jnp.float32)

    mo = oo = 0
    for p, M_h, O_h in zip(heads_params, Ms, Os):
        w1_h = jnp.transpose(p['w1_oihw'], (0, 2, 3, 1))        # (M,3,3,C)
        w1 = w1.at[mo:mo + M_h, :, :, :C].set(w1_h)
        s = p['gamma'] / jnp.sqrt(p['var'] + EPS)
        t = p['beta'] - p['mean'] * s + p['b1'] * s             # fold conv1 bias
        scale = scale.at[mo:mo + M_h].set(s)
        shift = shift.at[mo:mo + M_h].set(t)
        w2_h = jnp.transpose(p['w2_oihw'], (0, 2, 3, 1))        # (O,3,3,M)
        w2 = w2.at[oo:oo + O_h, :, :, mo:mo + M_h].set(w2_h)
        b2 = b2.at[oo:oo + O_h].set(p['b2'])
        mo += M_h
        oo += O_h

    # 0/1 validity masks for the 9 taps (SAME zero padding at image border).
    rr = jnp.arange(H * W, dtype=jnp.int32) // W
    cc = jnp.arange(H * W, dtype=jnp.int32) % W
    masks = []
    for ky in range(3):
        for kx in range(3):
            m = jnp.ones((H * W,), jnp.float32)
            if ky == 0:
                m = m * (rr >= 1)
            if ky == 2:
                m = m * (rr <= H - 2)
            if kx == 0:
                m = m * (cc >= 1)
            if kx == 2:
                m = m * (cc <= W - 2)
            masks.append(m)
    tap_mask = jnp.stack(masks, axis=0).astype(jnp.float32)     # (9, HW)

    return dict(
        w1=w1.reshape(Mp, 9 * Cp),
        scale=scale.reshape(Mp, 1),
        shift=shift.reshape(Mp, 1),
        w2=w2.reshape(Op, 9 * Mp),
        b2=b2.reshape(Op, 1),
        tap_mask=tap_mask,
        Cp=Cp, Mp=Mp, Op=Op, Otot=Otot)


def multi_task_head(x_nchw, heads_params):
    """Fused Pallas MultiTaskHead forward.  (N, C, H, W) -> (N, sum(O), H, W)."""
    N, C, H, W = x_nchw.shape
    HW = H * W
    pk = _pack_heads(heads_params, C, H, W)
    Cp, Mp, Op, Otot = pk['Cp'], pk['Mp'], pk['Op'], pk['Otot']

    x_flat = x_nchw.reshape(N, C, HW).astype(jnp.float32)       # NCHW, no transpose
    if Cp > C:
        x_flat = jnp.pad(x_flat, ((0, 0), (0, Cp - C), (0, 0)))

    out_flat = pl.pallas_call(
        functools.partial(_multi_task_head_kernel, H=H, W=W),
        out_shape=jax.ShapeDtypeStruct((N, Otot, HW), jnp.float32),
        grid_spec=pltpu.PrefetchScalarGridSpec(
            num_scalar_prefetch=0,
            grid=(N,),
            in_specs=[
                pl.BlockSpec((1, Cp, HW), lambda n: (n, 0, 0)),
                pl.BlockSpec((9, HW), lambda n: (0, 0)),
                pl.BlockSpec((Mp, 9 * Cp), lambda n: (0, 0)),
                pl.BlockSpec((Mp, 1), lambda n: (0, 0)),
                pl.BlockSpec((Mp, 1), lambda n: (0, 0)),
                pl.BlockSpec((Op, 9 * Mp), lambda n: (0, 0)),
                pl.BlockSpec((Op, 1), lambda n: (0, 0)),
            ],
            out_specs=pl.BlockSpec((1, Otot, HW), lambda n: (n, 0, 0)),
        ),
        compiler_params=pltpu.CompilerParams(
            dimension_semantics=("parallel",)),
    )(x_flat, pk['tap_mask'], pk['w1'], pk['scale'], pk['shift'],
      pk['w2'], pk['b2'])

    return out_flat.reshape(N, Otot, H, W)


# ----------------------------- reference (pure JAX, NCHW like PyTorch) -------

def _ref_normal_head(x_nchw, w1_oihw, b1, gamma, beta, mean, var, w2_oihw, b2):
    dn = ('NCHW', 'OIHW', 'NCHW')
    y = lax.conv_general_dilated(x_nchw, w1_oihw, (1, 1), 'SAME',
                                 dimension_numbers=dn)
    y = y + b1[None, :, None, None]
    y = (y - mean[None, :, None, None]) / jnp.sqrt(var + EPS)[None, :, None, None]
    y = y * gamma[None, :, None, None] + beta[None, :, None, None]
    y = jnp.maximum(y, 0.0)
    y = lax.conv_general_dilated(y, w2_oihw, (1, 1), 'SAME',
                                 dimension_numbers=dn)
    return y + b2[None, :, None, None]


def _ref_multi_task_head(x_nchw, heads_params):
    return jnp.concatenate(
        [_ref_normal_head(x_nchw, p['w1_oihw'], p['b1'], p['gamma'],
                          p['beta'], p['mean'], p['var'], p['w2_oihw'],
                          p['b2']) for p in heads_params], axis=1)


# ----------------------------- parameter construction ------------------------

def _make_head_params(key, in_ch, out_ch):
    mid = in_ch // 4
    ks = jax.random.split(key, 8)
    return {
        'w1_oihw': 0.1 * jax.random.normal(ks[0], (mid, in_ch, 3, 3), jnp.float32),
        'b1': 0.1 * jax.random.normal(ks[1], (mid,), jnp.float32),
        'gamma': 1.0 + 0.1 * jax.random.normal(ks[2], (mid,), jnp.float32),
        'beta': 0.1 * jax.random.normal(ks[3], (mid,), jnp.float32),
        'mean': 0.1 * jax.random.normal(ks[4], (mid,), jnp.float32),
        'var': 1.0 + 0.5 * jax.nn.sigmoid(
            jax.random.normal(ks[5], (mid,), jnp.float32)),
        'w2_oihw': 0.1 * jax.random.normal(ks[6], (out_ch, mid, 3, 3), jnp.float32),
        'b2': 0.1 * jax.random.normal(ks[7], (out_ch,), jnp.float32),
    }


if __name__ == "__main__":
    N, C, H, W = 2, 8, 16, 16              # input_channels=8 -> mid channels 2
    output_channels_list = [1, 2]

    key = jax.random.PRNGKey(0)
    kx, kp = jax.random.split(key)
    x = jax.random.normal(kx, (N, C, H, W), jnp.float32)

    hkeys = jax.random.split(kp, len(output_channels_list))
    heads_params = [_make_head_params(hk, C, oc)
                    for hk, oc in zip(hkeys, output_channels_list)]

    out = jax.block_until_ready(multi_task_head(x, heads_params))
    ref = jax.block_until_ready(_ref_multi_task_head(x, heads_params))

    assert out.shape == (N, sum(output_channels_list), H, W), out.shape
    max_err = float(jnp.max(jnp.abs(out - ref)))
    assert jnp.allclose(out, ref, rtol=1e-3, atol=1e-3), max_err

    print("KERNEL_OK")
</pallas_src>

<mosaic_0001>
module attributes {stable_mosaic.version = 11 : i64} {
  func.func @_multi_task_head_kernel(%arg0: i32, %arg1: memref<1x8x256xf32, #tpu.memory_space<vmem>>, %arg2: memref<9x256xf32, #tpu.memory_space<vmem>>, %arg3: memref<8x72xf32, #tpu.memory_space<vmem>>, %arg4: memref<8x1xf32, #tpu.memory_space<vmem>>, %arg5: memref<8x1xf32, #tpu.memory_space<vmem>>, %arg6: memref<8x72xf32, #tpu.memory_space<vmem>>, %arg7: memref<8x1xf32, #tpu.memory_space<vmem>>, %arg8: memref<1x3x256xf32, #tpu.memory_space<vmem>>) attributes {dimension_semantics = [#tpu.dimension_semantics<parallel>], iteration_bounds = array<i64: 2>, scalar_prefetch = 0 : i64, scratch_operands = 0 : i64, tpu.core_type = #tpu.core_type<tc>, window_params = [{transform_indices = @transform_0, window_bounds = array<i64: 1, 8, 256>}, {pipeline_mode = #tpu.pipeline_mode<synchronous>, transform_indices = @transform_1, window_bounds = array<i64: 9, 256>}, {pipeline_mode = #tpu.pipeline_mode<synchronous>, transform_indices = @transform_2, window_bounds = array<i64: 8, 72>}, {pipeline_mode = #tpu.pipeline_mode<synchronous>, transform_indices = @transform_3, window_bounds = array<i64: 8, 1>}, {pipeline_mode = #tpu.pipeline_mode<synchronous>, transform_indices = @transform_4, window_bounds = array<i64: 8, 1>}, {pipeline_mode = #tpu.pipeline_mode<synchronous>, transform_indices = @transform_5, window_bounds = array<i64: 8, 72>}, {pipeline_mode = #tpu.pipeline_mode<synchronous>, transform_indices = @transform_6, window_bounds = array<i64: 8, 1>}, {transform_indices = @transform_7, window_bounds = array<i64: 1, 3, 256>}]} {
    %c0 = arith.constant 0 : index
    %c0_0 = arith.constant 0 : index
    %0 = vector.load %arg2[%c0, %c0_0] : memref<9x256xf32, #tpu.memory_space<vmem>>, vector<9x256xf32>
    %c0_1 = arith.constant 0 : index
    %c0_2 = arith.constant 0 : index
    %c0_3 = arith.constant 0 : index
    %1 = vector.load %arg1[%c0_1, %c0_2, %c0_3] : memref<1x8x256xf32, #tpu.memory_space<vmem>>, vector<1x8x256xf32>
    %2 = vector.shape_cast %1 : vector<1x8x256xf32> to vector<8x256xf32>
    %c0_4 = arith.constant 0 : index
    %c0_5 = arith.constant 0 : index
    %3 = vector.load %arg3[%c0_4, %c0_5] : memref<8x72xf32, #tpu.memory_space<vmem>>, vector<8x72xf32>
    %c17_i32 = arith.constant 17 : i32
    %4 = tpu.dynamic_rotate %2 by %c17_i32 dim 1 : vector<8x256xf32>, i32 -> vector<8x256xf32>
    %5 = vector.extract_strided_slice %0 {offsets = [0, 0], sizes = [1, 256], strides = [1, 1]} : vector<9x256xf32> to vector<1x256xf32>
    %6 = vector.broadcast %5 : vector<1x256xf32> to vector<8x256xf32>
    %7 = arith.mulf %4, %6 : vector<8x256xf32>
    %c16_i32 = arith.constant 16 : i32
    %8 = tpu.dynamic_rotate %2 by %c16_i32 dim 1 : vector<8x256xf32>, i32 -> vector<8x256xf32>
    %9 = vector.extract_strided_slice %0 {offsets = [1, 0], sizes = [1, 256], strides = [1, 1]} : vector<9x256xf32> to vector<1x256xf32>
    %10 = vector.broadcast %9 : vector<1x256xf32> to vector<8x256xf32>
    %11 = arith.mulf %8, %10 : vector<8x256xf32>
    %c15_i32 = arith.constant 15 : i32
    %12 = tpu.dynamic_rotate %2 by %c15_i32 dim 1 : vector<8x256xf32>, i32 -> vector<8x256xf32>
    %13 = vector.extract_strided_slice %0 {offsets = [2, 0], sizes = [1, 256], strides = [1, 1]} : vector<9x256xf32> to vector<1x256xf32>
    %14 = vector.broadcast %13 : vector<1x256xf32> to vector<8x256xf32>
    %15 = arith.mulf %12, %14 : vector<8x256xf32>
    %c1_i32 = arith.constant 1 : i32
    %16 = tpu.dynamic_rotate %2 by %c1_i32 dim 1 : vector<8x256xf32>, i32 -> vector<8x256xf32>
    %17 = vector.extract_strided_slice %0 {offsets = [3, 0], sizes = [1, 256], strides = [1, 1]} : vector<9x256xf32> to vector<1x256xf32>
    %18 = vector.broadcast %17 : vector<1x256xf32> to vector<8x256xf32>
    %19 = arith.mulf %16, %18 : vector<8x256xf32>
    %c255_i32 = arith.constant 255 : i32
    %20 = tpu.dynamic_rotate %2 by %c255_i32 dim 1 : vector<8x256xf32>, i32 -> vector<8x256xf32>
    %21 = vector.extract_strided_slice %0 {offsets = [5, 0], sizes = [1, 256], strides = [1, 1]} : vector<9x256xf32> to vector<1x256xf32>
    %22 = vector.broadcast %21 : vector<1x256xf32> to vector<8x256xf32>
    %23 = arith.mulf %20, %22 : vector<8x256xf32>
    %c241_i32 = arith.constant 241 : i32
    %24 = tpu.dynamic_rotate %2 by %c241_i32 dim 1 : vector<8x256xf32>, i32 -> vector<8x256xf32>
    %25 = vector.extract_strided_slice %0 {offsets = [6, 0], sizes = [1, 256], strides = [1, 1]} : vector<9x256xf32> to vector<1x256xf32>
    %26 = vector.broadcast %25 : vector<1x256xf32> to vector<8x256xf32>
    %27 = arith.mulf %24, %26 : vector<8x256xf32>
    %c240_i32 = arith.constant 240 : i32
    %28 = tpu.dynamic_rotate %2 by %c240_i32 dim 1 : vector<8x256xf32>, i32 -> vector<8x256xf32>
    %29 = vector.extract_strided_slice %0 {offsets = [7, 0], sizes = [1, 256], strides = [1, 1]} : vector<9x256xf32> to vector<1x256xf32>
    %30 = vector.broadcast %29 : vector<1x256xf32> to vector<8x256xf32>
    %31 = arith.mulf %28, %30 : vector<8x256xf32>
    %c239_i32 = arith.constant 239 : i32
    %32 = tpu.dynamic_rotate %2 by %c239_i32 dim 1 : vector<8x256xf32>, i32 -> vector<8x256xf32>
    %33 = vector.extract_strided_slice %0 {offsets = [8, 0], sizes = [1, 256], strides = [1, 1]} : vector<9x256xf32> to vector<1x256xf32>
    %34 = vector.broadcast %33 : vector<1x256xf32> to vector<8x256xf32>
    %35 = arith.mulf %32, %34 : vector<8x256xf32>
    %36 = tpu.concatenate %7, %11, %15, %19, %2, %23, %27, %31, %35 in 0 : vector<8x256xf32>, vector<8x256xf32>, vector<8x256xf32>, vector<8x256xf32>, vector<8x256xf32>, vector<8x256xf32>, vector<8x256xf32>, vector<8x256xf32>, vector<8x256xf32> -> vector<72x256xf32>
    %cst = arith.constant dense<0.000000e+00> : vector<8x256xf32>
    %37 = tpu.matmul %3, %36, %cst {dimension_numbers = #tpu.dot_dimension_numbers<[1], [0], [0], [1], [0, 0, 1, 1], [], []>} : vector<8x72xf32>, vector<72x256xf32>, vector<8x256xf32> -> vector<8x256xf32>
    %c0_6 = arith.constant 0 : index
    %c0_7 = arith.constant 0 : index
    %38 = vector.load %arg4[%c0_6, %c0_7] : memref<8x1xf32, #tpu.memory_space<vmem>>, vector<8x1xf32>
    %39 = vector.broadcast %38 : vector<8x1xf32> to vector<8x256xf32>
    %40 = arith.mulf %37, %39 : vector<8x256xf32>
    %c0_8 = arith.constant 0 : index
    %c0_9 = arith.constant 0 : index
    %41 = vector.load %arg5[%c0_8, %c0_9] : memref<8x1xf32, #tpu.memory_space<vmem>>, vector<8x1xf32>
    %42 = vector.broadcast %41 : vector<8x1xf32> to vector<8x256xf32>
    %43 = arith.addf %40, %42 : vector<8x256xf32>
    %cst_10 = arith.constant 0.000000e+00 : f32
    %44 = vector.broadcast %cst_10 : f32 to vector<8x256xf32>
    %45 = arith.maximumf %43, %44 : vector<8x256xf32>
    %c0_11 = arith.constant 0 : index
    %c0_12 = arith.constant 0 : index
    %46 = vector.load %arg6[%c0_11, %c0_12] : memref<8x72xf32, #tpu.memory_space<vmem>>, vector<8x72xf32>
    %c17_i32_13 = arith.constant 17 : i32
    %47 = tpu.dynamic_rotate %45 by %c17_i32_13 dim 1 : vector<8x256xf32>, i32 -> vector<8x256xf32>
    %48 = vector.extract_strided_slice %0 {offsets = [0, 0], sizes = [1, 256], strides = [1, 1]} : vector<9x256xf32> to vector<1x256xf32>
    %49 = vector.broadcast %48 : vector<1x256xf32> to vector<8x256xf32>
    %50 = arith.mulf %47, %49 : vector<8x256xf32>
    %c16_i32_14 = arith.constant 16 : i32
    %51 = tpu.dynamic_rotate %45 by %c16_i32_14 dim 1 : vector<8x256xf32>, i32 -> vector<8x256xf32>
    %52 = vector.extract_strided_slice %0 {offsets = [1, 0], sizes = [1, 256], strides = [1, 1]} : vector<9x256xf32> to vector<1x256xf32>
    %53 = vector.broadcast %52 : vector<1x256xf32> to vector<8x256xf32>
    %54 = arith.mulf %51, %53 : vector<8x256xf32>
    %c15_i32_15 = arith.constant 15 : i32
    %55 = tpu.dynamic_rotate %45 by %c15_i32_15 dim 1 : vector<8x256xf32>, i32 -> vector<8x256xf32>
    %56 = vector.extract_strided_slice %0 {offsets = [2, 0], sizes = [1, 256], strides = [1, 1]} : vector<9x256xf32> to vector<1x256xf32>
    %57 = vector.broadcast %56 : vector<1x256xf32> to vector<8x256xf32>
    %58 = arith.mulf %55, %57 : vector<8x256xf32>
    %c1_i32_16 = arith.constant 1 : i32
    %59 = tpu.dynamic_rotate %45 by %c1_i32_16 dim 1 : vector<8x256xf32>, i32 -> vector<8x256xf32>
    %60 = vector.extract_strided_slice %0 {offsets = [3, 0], sizes = [1, 256], strides = [1, 1]} : vector<9x256xf32> to vector<1x256xf32>
    %61 = vector.broadcast %60 : vector<1x256xf32> to vector<8x256xf32>
    %62 = arith.mulf %59, %61 : vector<8x256xf32>
    %c255_i32_17 = arith.constant 255 : i32
    %63 = tpu.dynamic_rotate %45 by %c255_i32_17 dim 1 : vector<8x256xf32>, i32 -> vector<8x256xf32>
    %64 = vector.extract_strided_slice %0 {offsets = [5, 0], sizes = [1, 256], strides = [1, 1]} : vector<9x256xf32> to vector<1x256xf32>
    %65 = vector.broadcast %64 : vector<1x256xf32> to vector<8x256xf32>
    %66 = arith.mulf %63, %65 : vector<8x256xf32>
    %c241_i32_18 = arith.constant 241 : i32
    %67 = tpu.dynamic_rotate %45 by %c241_i32_18 dim 1 : vector<8x256xf32>, i32 -> vector<8x256xf32>
    %68 = vector.extract_strided_slice %0 {offsets = [6, 0], sizes = [1, 256], strides = [1, 1]} : vector<9x256xf32> to vector<1x256xf32>
    %69 = vector.broadcast %68 : vector<1x256xf32> to vector<8x256xf32>
    %70 = arith.mulf %67, %69 : vector<8x256xf32>
    %c240_i32_19 = arith.constant 240 : i32
    %71 = tpu.dynamic_rotate %45 by %c240_i32_19 dim 1 : vector<8x256xf32>, i32 -> vector<8x256xf32>
    %72 = vector.extract_strided_slice %0 {offsets = [7, 0], sizes = [1, 256], strides = [1, 1]} : vector<9x256xf32> to vector<1x256xf32>
    %73 = vector.broadcast %72 : vector<1x256xf32> to vector<8x256xf32>
    %74 = arith.mulf %71, %73 : vector<8x256xf32>
    %c239_i32_20 = arith.constant 239 : i32
    %75 = tpu.dynamic_rotate %45 by %c239_i32_20 dim 1 : vector<8x256xf32>, i32 -> vector<8x256xf32>
    %76 = vector.extract_strided_slice %0 {offsets = [8, 0], sizes = [1, 256], strides = [1, 1]} : vector<9x256xf32> to vector<1x256xf32>
    %77 = vector.broadcast %76 : vector<1x256xf32> to vector<8x256xf32>
    %78 = arith.mulf %75, %77 : vector<8x256xf32>
    %79 = tpu.concatenate %50, %54, %58, %62, %45, %66, %70, %74, %78 in 0 : vector<8x256xf32>, vector<8x256xf32>, vector<8x256xf32>, vector<8x256xf32>, vector<8x256xf32>, vector<8x256xf32>, vector<8x256xf32>, vector<8x256xf32>, vector<8x256xf32> -> vector<72x256xf32>
    %cst_21 = arith.constant dense<0.000000e+00> : vector<8x256xf32>
    %80 = tpu.matmul %46, %79, %cst_21 {dimension_numbers = #tpu.dot_dimension_numbers<[1], [0], [0], [1], [0, 0, 1, 1], [], []>} : vector<8x72xf32>, vector<72x256xf32>, vector<8x256xf32> -> vector<8x256xf32>
    %c0_22 = arith.constant 0 : index
    %c0_23 = arith.constant 0 : index
    %81 = vector.load %arg7[%c0_22, %c0_23] : memref<8x1xf32, #tpu.memory_space<vmem>>, vector<8x1xf32>
    %82 = vector.broadcast %81 : vector<8x1xf32> to vector<8x256xf32>
    %83 = arith.addf %80, %82 : vector<8x256xf32>
    %84 = vector.extract_strided_slice %83 {offsets = [0, 0], sizes = [3, 256], strides = [1, 1]} : vector<8x256xf32> to vector<3x256xf32>
    %c0_24 = arith.constant 0 : index
    %c0_25 = arith.constant 0 : index
    %c0_26 = arith.constant 0 : index
    %85 = vector.load %arg8[%c0_24, %c0_25, %c0_26] : memref<1x3x256xf32, #tpu.memory_space<vmem>>, vector<1x3x256xf32>
    %86 = vector.shape_cast %85 : vector<1x3x256xf32> to vector<3x256xf32>
    %87 = vector.shape_cast %84 : vector<3x256xf32> to vector<1x3x256xf32>
    tpu.vector_store %arg8[%c0_24, %c0_25, %c0_26], %87 {strides = array<i32>} : memref<1x3x256xf32, #tpu.memory_space<vmem>>, vector<1x3x256xf32>,
    return
  }
  func.func @transform_0(%arg0: i32) -> (i32, i32, i32) {
    %c0_i32 = arith.constant 0 : i32
    %c0_i32_0 = arith.constant 0 : i32
    %c0_i32_1 = arith.constant 0 : i32
    return %arg0, %c0_i32, %c0_i32_0 : i32, i32, i32
  }
  func.func @transform_1(%arg0: i32) -> (i32, i32) {
    %c0_i32 = arith.constant 0 : i32
    %c0_i32_0 = arith.constant 0 : i32
    %c0_i32_1 = arith.constant 0 : i32
    return %c0_i32, %c0_i32_0 : i32, i32
  }
  func.func @transform_2(%arg0: i32) -> (i32, i32) {
    %c0_i32 = arith.constant 0 : i32
    %c0_i32_0 = arith.constant 0 : i32
    %c0_i32_1 = arith.constant 0 : i32
    return %c0_i32, %c0_i32_0 : i32, i32
  }
  func.func @transform_3(%arg0: i32) -> (i32, i32) {
    %c0_i32 = arith.constant 0 : i32
    %c0_i32_0 = arith.constant 0 : i32
    %c0_i32_1 = arith.constant 0 : i32
    return %c0_i32, %c0_i32_0 : i32, i32
  }
  func.func @transform_4(%arg0: i32) -> (i32, i32) {
    %c0_i32 = arith.constant 0 : i32
    %c0_i32_0 = arith.constant 0 : i32
    %c0_i32_1 = arith.constant 0 : i32
    return %c0_i32, %c0_i32_0 : i32, i32
  }
  func.func @transform_5(%arg0: i32) -> (i32, i32) {
    %c0_i32 = arith.constant 0 : i32
    %c0_i32_0 = arith.constant 0 : i32
    %c0_i32_1 = arith.constant 0 : i32
    return %c0_i32, %c0_i32_0 : i32, i32
  }
  func.func @transform_6(%arg0: i32) -> (i32, i32) {
    %c0_i32 = arith.constant 0 : i32
    %c0_i32_0 = arith.constant 0 : i32
    %c0_i32_1 = arith.constant 0 : i32
    return %c0_i32, %c0_i32_0 : i32, i32
  }
  func.func @transform_7(%arg0: i32) -> (i32, i32, i32) {
    %c0_i32 = arith.constant 0 : i32
    %c0_i32_0 = arith.constant 0 : i32
    %c0_i32_1 = arith.constant 0 : i32
    return %arg0, %c0_i32, %c0_i32_0 : i32, i32, i32
  }
}

</mosaic_0001>

<llo_original>
// kernel: tpu_custom_call.1
$region0: #{tpu_custom_call.1}
  #allocation0 [shape = 'u32[]', space=smem, size = 0x4, offset = 0x4, fixed_abs, tag = 'smem constant byte address 0x4 - core index']
  #allocation1 [shape = 'u32[72,128]{1,0:T(1,128)}', space=vmem, size = 0x9000, scoped, tag = 'internal scratch']
  %s0 = inlined_call_operand.hbm [shape: f32[2,8,256], index: 0, kind: input, shape index: {}]
  %s1 = inlined_call_operand.hbm [shape: f32[9,256], index: 1, kind: input, shape index: {}]
  %s2 = inlined_call_operand.vmem [shape: f32[8,72], index: 2, kind: input, shape index: {}]
  %s3 = inlined_call_operand.vmem [shape: f32[8,1], index: 3, kind: input, shape index: {}]
  %s4 = inlined_call_operand.vmem [shape: f32[8,1], index: 4, kind: input, shape index: {}]
  %s5 = inlined_call_operand.vmem [shape: f32[8,72], index: 5, kind: input, shape index: {}]
  %s6 = inlined_call_operand.vmem [shape: f32[8,1], index: 6, kind: input, shape index: {}]
  %s7 = inlined_call_operand.vmem [shape: f32[2,3,256], index: 7, kind: output, shape index: {}]
  %s8 = sld [smem:[#allocation0]]
  $region69: #{tpu_custom_call.1} parent=0
    _
  %s10 = ssub.s32 1, %s8
  %s11 = scalar_select 0, %s10, %s8
  $region1: #{tpu_custom_call.1} parent=0
    #allocation2 [shape = 'u8[16384]{0}', space=vmem, size = 0x4000, scoped, tag = 'input window, operand 0']
    #allocation3 [shape = 's32[2]{0}', space=sflag, size = 0x8, scoped, tag = 'scoped memory for tpu_custom_call.1']
    #allocation4 [shape = 'u8[16384]{0}', space=vmem, size = 0x4000, scoped, tag = 'input window, operand 1, single buffered']
    #allocation5 [shape = 's32[1]{0}', space=sflag, size = 0x4, scoped, tag = 'scoped memory for tpu_custom_call.1']
    %12 = vsyncpa [#allocation3], 0
    %s13 = scalar_lea.sflag [#allocation3], 1
    %14 = vsyncpa %s13, 0
    %15 = vsyncpa [#allocation5], 0
    loop: start=0, step=1, limit=4
    $region2: #{tpu_custom_call.1} parent=1 // loop_pre_header
      _
    $region3: #{tpu_custom_call.1} parent=1 // loop_header
      %s17 = sphi 0, %s21
      %p18 = scmp.ge.s32.totalorder %s17, 4
      %s27 = sphi 0, %s29
      %s30 = sphi 0, %s27
      %s31 = sphi 0, %s30
      %s47 = sphi 0, %s31
      %s51 = sphi 0, %s51
      %s53 = sphi 0, %s51
      %s54 = sphi 0, %s53
      %s68 = sphi 0, %s54
      %s72 = sphi 0, %s72
      %s74 = sphi 0, %s72
      %s75 = sphi 0, %s74
      %s89 = sphi 0, %s75
      %s93 = sphi 0, %s93
      %s95 = sphi 0, %s93
      %s96 = sphi 0, %s95
      %s110 = sphi 0, %s96
      %s114 = sphi 0, %s114
      %s116 = sphi 0, %s114
      %s117 = sphi 0, %s116
      %s131 = sphi 0, %s117
      %s135 = sphi 0, %s135
      %s137 = sphi 0, %s135
      %s138 = sphi 0, %s137
      %s152 = sphi 0, %s138
      %s156 = sphi 0, %s156
      %s158 = sphi 0, %s156
      %s159 = sphi 0, %s158
      %s173 = sphi 0, %s159
      %s179 = sphi 0, %s181
      %s182 = sphi 0, %s179
      %s183 = sphi 0, %s182
      %s199 = sphi 0, %s183
    $region4: #{tpu_custom_call.1} parent=1 // loop_header_branch
      %20 = sbr.rel (%p18) target = $region8
    $region5: #{tpu_custom_call.1} parent=1 // loop_body
      %s22 = ssub.s32 %s17, 1
      %s23 = ssub.s32 %s17, 2
      %s24 = sadd.s32 %s17, 1
      %s25 = ssub.s32 %s17, %s24
      %p26 = scmp.eq.s32.totalorder %s25, 0
      %s28 = sadd.s32 %s27, 1
      %s29 = scalar_select %p26, %s27, %s28
      %p32 = pneg %p26
      %p33 = scmp.eq.s32.totalorder %s17, 1
      %p34 = por %p32, %p33
      %p35 = scmp.ne.s32.totalorder %s27, %s30
      %p36 = scmp.eq.s32.totalorder %s17, 0
      %p37 = por %p35, %p36
      %p38 = scmp.ne.s32.totalorder %s27, %s30
      %p39 = scmp.eq.s32.totalorder %s22, 1
      %p40 = por %p38, %p39
      %p41 = scmp.ne.s32.totalorder %s30, %s31
      %p42 = scmp.eq.s32.totalorder %s22, 0
      %p43 = por %p41, %p42
      %p44 = scmp.ne.s32.totalorder %s30, %s31
      %p45 = scmp.eq.s32.totalorder %s23, 1
      %p46 = por %p44, %p45
      %p48 = scmp.ne.s32.totalorder %s31, %s47
      %p49 = scmp.eq.s32.totalorder %s23, 0
      %p50 = por %p48, %p49
      %s52 = sadd.s32 %s51, 1
      %p55 = scmp.eq.s32.totalorder %s17, 1
      %p56 = scmp.ne.s32.totalorder %s51, %s53
      %p57 = scmp.eq.s32.totalorder %s17, 0
      %p58 = por %p56, %p57
      %p59 = scmp.ne.s32.totalorder %s51, %s53
      %p60 = scmp.eq.s32.totalorder %s22, 1
      %p61 = por %p59, %p60
      %p62 = scmp.ne.s32.totalorder %s53, %s54
      %p63 = scmp.eq.s32.totalorder %s22, 0
      %p64 = por %p62, %p63
      %p65 = scmp.ne.s32.totalorder %s53, %s54
      %p66 = scmp.eq.s32.totalorder %s23, 1
      %p67 = por %p65, %p66
      %p69 = scmp.ne.s32.totalorder %s54, %s68
      %p70 = scmp.eq.s32.totalorder %s23, 0
      %p71 = por %p69, %p70
      %s73 = sadd.s32 %s72, 1
      %p76 = scmp.eq.s32.totalorder %s17, 1
      %p77 = scmp.ne.s32.totalorder %s72, %s74
      %p78 = scmp.eq.s32.totalorder %s17, 0
      %p79 = por %p77, %p78
      %p80 = scmp.ne.s32.totalorder %s72, %s74
      %p81 = scmp.eq.s32.totalorder %s22, 1
      %p82 = por %p80, %p81
      %p83 = scmp.ne.s32.totalorder %s74, %s75
      %p84 = scmp.eq.s32.totalorder %s22, 0
      %p85 = por %p83, %p84
      %p86 = scmp.ne.s32.totalorder %s74, %s75
      %p87 = scmp.eq.s32.totalorder %s23, 1
      %p88 = por %p86, %p87
      %p90 = scmp.ne.s32.totalorder %s75, %s89
      %p91 = scmp.eq.s32.totalorder %s23, 0
      %p92 = por %p90, %p91
      %s94 = sadd.s32 %s93, 1
      %p97 = scmp.eq.s32.totalorder %s17, 1
      %p98 = scmp.ne.s32.totalorder %s93, %s95
      %p99 = scmp.eq.s32.totalorder %s17, 0
      %p100 = por %p98, %p99
      %p101 = scmp.ne.s32.totalorder %s93, %s95
      %p102 = scmp.eq.s32.totalorder %s22, 1
      %p103 = por %p101, %p102
      %p104 = scmp.ne.s32.totalorder %s95, %s96
      %p105 = scmp.eq.s32.totalorder %s22, 0
      %p106 = por %p104, %p105
      %p107 = scmp.ne.s32.totalorder %s95, %s96
      %p108 = scmp.eq.s32.totalorder %s23, 1
      %p109 = por %p107, %p108
      %p111 = scmp.ne.s32.totalorder %s96, %s110
      %p112 = scmp.eq.s32.totalorder %s23, 0
      %p113 = por %p111, %p112
      %s115 = sadd.s32 %s114, 1
      %p118 = scmp.eq.s32.totalorder %s17, 1
      %p119 = scmp.ne.s32.totalorder %s114, %s116
      %p120 = scmp.eq.s32.totalorder %s17, 0
      %p121 = por %p119, %p120
      %p122 = scmp.ne.s32.totalorder %s114, %s116
      %p123 = scmp.eq.s32.totalorder %s22, 1
      %p124 = por %p122, %p123
      %p125 = scmp.ne.s32.totalorder %s116, %s117
      %p126 = scmp.eq.s32.totalorder %s22, 0
      %p127 = por %p125, %p126
      %p128 = scmp.ne.s32.totalorder %s116, %s117
      %p129 = scmp.eq.s32.totalorder %s23, 1
      %p130 = por %p128, %p129
      %p132 = scmp.ne.s32.totalorder %s117, %s131
      %p133 = scmp.eq.s32.totalorder %s23, 0
      %p134 = por %p132, %p133
      %s136 = sadd.s32 %s135, 1
      %p139 = scmp.eq.s32.totalorder %s17, 1
      %p140 = scmp.ne.s32.totalorder %s135, %s137
      %p141 = scmp.eq.s32.totalorder %s17, 0
      %p142 = por %p140, %p141
      %p143 = scmp.ne.s32.totalorder %s135, %s137
      %p144 = scmp.eq.s32.totalorder %s22, 1
      %p145 = por %p143, %p144
      %p146 = scmp.ne.s32.totalorder %s137, %s138
      %p147 = scmp.eq.s32.totalorder %s22, 0
      %p148 = por %p146, %p147
      %p149 = scmp.ne.s32.totalorder %s137, %s138
      %p150 = scmp.eq.s32.totalorder %s23, 1
      %p151 = por %p149, %p150
      %p153 = scmp.ne.s32.totalorder %s138, %s152
      %p154 = scmp.eq.s32.totalorder %s23, 0
      %p155 = por %p153, %p154
      %s157 = sadd.s32 %s156, 1
      %p160 = scmp.eq.s32.totalorder %s17, 1
      %p161 = scmp.ne.s32.totalorder %s156, %s158
      %p162 = scmp.eq.s32.totalorder %s17, 0
      %p163 = por %p161, %p162
      %p164 = scmp.ne.s32.totalorder %s156, %s158
      %p165 = scmp.eq.s32.totalorder %s22, 1
      %p166 = por %p164, %p165
      %p167 = scmp.ne.s32.totalorder %s158, %s159
      %p168 = scmp.eq.s32.totalorder %s22, 0
      %p169 = por %p167, %p168
      %p170 = scmp.ne.s32.totalorder %s158, %s159
      %p171 = scmp.eq.s32.totalorder %s23, 1
      %p172 = por %p170, %p171
      %p174 = scmp.ne.s32.totalorder %s159, %s173
      %p175 = scmp.eq.s32.totalorder %s23, 0
      %p176 = por %p174, %p175
      %s177 = ssub.s32 %s17, %s24
      %p178 = scmp.eq.s32.totalorder %s177, 0
      %s180 = sadd.s32 %s179, 1
      %s181 = scalar_select %p178, %s179, %s180
      %p184 = pneg %p178
      %p185 = scmp.eq.s32.totalorder %s17, 1
      %p186 = por %p184, %p185
      %p187 = scmp.ne.s32.totalorder %s179, %s182
      %p188 = scmp.eq.s32.totalorder %s17, 0
      %p189 = por %p187, %p188
      %p190 = scmp.ne.s32.totalorder %s179, %s182
      %p191 = scmp.eq.s32.totalorder %s22, 1
      %p192 = por %p190, %p191
      %p193 = scmp.ne.s32.totalorder %s182, %s183
      %p194 = scmp.eq.s32.totalorder %s22, 0
      %p195 = por %p193, %p194
      %p196 = scmp.ne.s32.totalorder %s182, %s183
      %p197 = scmp.eq.s32.totalorder %s23, 1
      %p198 = por %p196, %p197
      %p200 = scmp.ne.s32.totalorder %s183, %s199
      %p201 = scmp.eq.s32.totalorder %s23, 0
      %p202 = por %p200, %p201
      %p203 = scmp.le.s32.totalorder 1, %s17
      %p204 = scmp.lt.s32.totalorder %s17, 3
      %p205 = pnand %p203, %p204
      %p206 = pneg %p205
      // Predicated region
      $region9: #{tpu_custom_call.1} parent=5 // pred_check
        _
      $region10: #{tpu_custom_call.1} parent=5 // pred_check_branch
        %208 = sbr.rel (%p205) target = $region12
      $region11: #{tpu_custom_call.1} parent=5 // pred_region
        %s209 = ssub.s32 %s17, 1
        // Predicated region
        $region13: #{tpu_custom_call.1} parent=11 // pred_check
          %p210 = pneg %p64
        $region14: #{tpu_custom_call.1} parent=11 // pred_check_branch
          %212 = sbr.rel (%p210) target = $region16
        $region15: #{tpu_custom_call.1} parent=11 // pred_region
          %214 = vsyncadd [#allocation5], 0
          %s215 = sshll.u32 %s1, 4
          %s216 = int_to_ptr.hbm [resolvable:$true] %s215
          %s217 = sshll.u32 [#allocation4], 4
          %s218 = int_to_ptr.vmem [resolvable:$true] %s217
          %223 = dma.hbm_to_vmem [thread:$0]  %s216, 512, %s218, [#allocation5], 256, 256, 16
        $region16: #{tpu_custom_call.1} parent=11 // pred_fallthru
          _
        // Predicated region
        $region17: #{tpu_custom_call.1} parent=11 // pred_check
          %p224 = pneg %p85
        $region18: #{tpu_custom_call.1} parent=11 // pred_check_branch
          %226 = sbr.rel (%p224) target = $region20
        $region19: #{tpu_custom_call.1} parent=11 // pred_region
          _
        $region20: #{tpu_custom_call.1} parent=11 // pred_fallthru
          _
        // Predicated region
        $region21: #{tpu_custom_call.1} parent=11 // pred_check
          %p227 = pneg %p106
        $region22: #{tpu_custom_call.1} parent=11 // pred_check_branch
          %229 = sbr.rel (%p227) target = $region24
        $region23: #{tpu_custom_call.1} parent=11 // pred_region
          _
        $region24: #{tpu_custom_call.1} parent=11 // pred_fallthru
          _
        // Predicated region
        $region25: #{tpu_custom_call.1} parent=11 // pred_check
          %p230 = pneg %p127
        $region26: #{tpu_custom_call.1} parent=11 // pred_check_branch
          %232 = sbr.rel (%p230) target = $region28
        $region27: #{tpu_custom_call.1} parent=11 // pred_region
          _
        $region28: #{tpu_custom_call.1} parent=11 // pred_fallthru
          _
        // Predicated region
        $region29: #{tpu_custom_call.1} parent=11 // pred_check
          %p233 = pneg %p148
        $region30: #{tpu_custom_call.1} parent=11 // pred_check_branch
          %235 = sbr.rel (%p233) target = $region32
        $region31: #{tpu_custom_call.1} parent=11 // pred_region
          _
        $region32: #{tpu_custom_call.1} parent=11 // pred_fallthru
          _
        // Predicated region
        $region33: #{tpu_custom_call.1} parent=11 // pred_check
          %p236 = pneg %p169
        $region34: #{tpu_custom_call.1} parent=11 // pred_check_branch
          %238 = sbr.rel (%p236) target = $region36
        $region35: #{tpu_custom_call.1} parent=11 // pred_region
          _
        $region36: #{tpu_custom_call.1} parent=11 // pred_fallthru
          _
      $region12: #{tpu_custom_call.1} parent=5 // pred_fallthru
        _
      %p239 = scmp.lt.s32.totalorder %s17, 2
      // Predicated region
      $region37: #{tpu_custom_call.1} parent=5 // pred_check
        %p240 = pneg %p239
      $region38: #{tpu_custom_call.1} parent=5 // pred_check_branch
        %242 = sbr.rel (%p240) target = $region40
      $region39: #{tpu_custom_call.1} parent=5 // pred_region
        // Predicated region
        $region41: #{tpu_custom_call.1} parent=39 // pred_check
          %p243 = pneg %p37
        $region42: #{tpu_custom_call.1} parent=39 // pred_check_branch
          %245 = sbr.rel (%p243) target = $region44
        $region43: #{tpu_custom_call.1} parent=39 // pred_region
          %s246 = sand.u32 %s27, 1
          %s247 = scalar_lea.sflag [#allocation3], %s246
          %s248 = sand.u32 %s27, 1
          %s249 = smul.addr %s248, 16
          %s250 = scalar_lea.vmem [#allocation2], %s249
          %252 = vsyncadd %s247, 0
          %s253 = smul.addr %s17, 2
          %s254 = smul.addr %s253, 8
          %s255 = scalar_lea.hbm %s0, %s254
          %s257 = sshll.u32 %s255, 4
          %s258 = int_to_ptr.hbm [resolvable:$true] %s257
          %s259 = sshll.u32 %s250, 4
          %s260 = int_to_ptr.vmem [resolvable:$true] %s259
          %262 = dma.hbm_to_vmem [thread:$0]  %s258, 256, %s260, %s247
        $region44: #{tpu_custom_call.1} parent=39 // pred_fallthru
          _
      $region40: #{tpu_custom_call.1} parent=5 // pred_fallthru
        _
      %p263 = scmp.le.s32.totalorder 1, %s17
      %p264 = scmp.lt.s32.totalorder %s17, 3
      %p265 = pnand %p263, %p264
      %p266 = pneg %p265
      // Predicated region
      $region45: #{tpu_custom_call.1} parent=5 // pred_check
        _
      $region46: #{tpu_custom_call.1} parent=5 // pred_check_branch
        %268 = sbr.rel (%p265) target = $region48
      $region47: #{tpu_custom_call.1} parent=5 // pred_region
        %s269 = ssub.s32 %s17, 1
        %s270 = sand.u32 %s30, 1
        %s271 = scalar_lea.sflag [#allocation3], %s270
        %s272 = sand.u32 %s30, 1
        %s273 = smul.addr %s272, 16
        %s274 = scalar_lea.vmem [#allocation2], %s273
        // Predicated region
        $region49: #{tpu_custom_call.1} parent=47 // pred_check
          %p275 = pneg %p43
        $region50: #{tpu_custom_call.1} parent=47 // pred_check_branch
          %277 = sbr.rel (%p275) target = $region52
        $region51: #{tpu_custom_call.1} parent=47 // pred_region
          %279 = dma.done %s271, 256
        $region52: #{tpu_custom_call.1} parent=47 // pred_fallthru
          _
        // Predicated region
        $region53: #{tpu_custom_call.1} parent=47 // pred_check
          %p280 = pneg %p64
        $region54: #{tpu_custom_call.1} parent=47 // pred_check_branch
          %282 = sbr.rel (%p280) target = $region56
        $region55: #{tpu_custom_call.1} parent=47 // pred_region
          %284 = dma.done [#allocation5], 512
        $region56: #{tpu_custom_call.1} parent=47 // pred_fallthru
          _
        %s285 = sand.u32 %s30, 1
        %s286 = scalar_lea.sflag [#allocation3], %s285
        %s287 = sand.u32 %s30, 1
        %s288 = smul.addr %s287, 16
        %s289 = scalar_lea.vmem [#allocation2], %s288
        %p290 = pneg %p43
        %p291 = pneg %p40
        %p292 = pneg %p64
        %p293 = pneg %p61
        %p294 = pneg %p85
        %p295 = pneg %p82
        %p296 = pneg %p106
        %p297 = pneg %p103
        %p298 = pneg %p127
        %p299 = pneg %p124
        %p300 = pneg %p148
        %p301 = pneg %p145
        %p302 = pneg %p169
        %p303 = pneg %p166
        %p304 = pneg %p195
        %p305 = pneg %p192
        %p306 = scmp.lt.s32.totalorder %s22, 1
        %s307 = scalar_select %p306, %s22, 1
        %s308 = smul.addr %s307, 2
        %s309 = smul.addr %s308, 4
        %s310 = scalar_lea.vmem %s7, %s309
        %p311 = scmp.lt.s32.totalorder %s22, 1
        %s312 = scalar_select %p311, %s22, 1
        %s313 = smul.addr %s312, 2
        %s314 = smul.addr %s313, 4
        %s315 = scalar_lea.vmem %s7, %s314
        %v316 = vld [vmem:[#allocation4] sm:$0xff]
        %v317 = vld [vmem:[#allocation4 + $0x8] sm:$0xff]
        %v318 = vld [vmem:[#allocation4 + $0x10] sm:$0x1]
        %v319 = vld [vmem:[#allocation4 + $0x18] sm:$0x1]
        %v320 = vld [vmem:[%s274] sm:$0xff]
        %v321 = vld [vmem:[%s274 + $0x8] sm:$0xff]
        %v322 = vld [vmem:[%s2] sm:$0xff]
        %323 = vrot.lane.b32.xlu0 %v320, 17
        %v324 = vpop.permute.xlu0 %323
        %325 = vrot.lane.b32.xlu0 %v321, 17
        %v326 = vpop.permute.xlu0 %325
        %v327 = vlaneseq
        %v328 = vand.u32 %v327, 127
        %vm329 = vcmp.lt.s32.totalorder %v328, 17
        %v330 = vsel %vm329, %v324, %v326
        %v331 = vsel %vm329, %v326, %v324
        %v332 = vperm.slane %v316, 0
        %v333 = vperm.slane %v317, 0
        %v334 = vmul.f32 %v331, %v332
        %v335 = vmul.f32 %v330, %v333
        %336 = vrot.lane.b32.xlu0 %v320, 16
        %v337 = vpop.permute.xlu0 %336
        %338 = vrot.lane.b32.xlu0 %v321, 16
        %v339 = vpop.permute.xlu0 %338
        %vm340 = vcmp.lt.s32.totalorder %v328, 16
        %v341 = vsel %vm340, %v337, %v339
        %v342 = vsel %vm340, %v339, %v337
        %v343 = vperm.slane %v316, 1
        %v344 = vperm.slane %v317, 1
        %v345 = vmul.f32 %v342, %v343
        %v346 = vmul.f32 %v341, %v344
        %347 = vrot.lane.b32.xlu0 %v320, 15
        %v348 = vpop.permute.xlu0 %347
        %349 = vrot.lane.b32.xlu0 %v321, 15
        %v350 = vpop.permute.xlu0 %349
        %vm351 = vcmp.lt.s32.totalorder %v328, 15
        %v352 = vsel %vm351, %v348, %v350
        %v353 = vsel %vm351, %v350, %v348
        %v354 = vperm.slane %v316, 2
        %v355 = vperm.slane %v317, 2
        %v356 = vmul.f32 %v353, %v354
        %v357 = vmul.f32 %v352, %v355
        %358 = vrot.lane.b32.xlu0 %v320, 1
        %v359 = vpop.permute.xlu0 %358
        %360 = vrot.lane.b32.xlu0 %v321, 1
        %v361 = vpop.permute.xlu0 %360
        %vm362 = vcmp.lt.s32.totalorder %v328, 1
        %v363 = vsel %vm362, %v359, %v361
        %v364 = vsel %vm362, %v361, %v359
        %v365 = vperm.slane %v316, 3
        %v366 = vperm.slane %v317, 3
        %v367 = vmul.f32 %v364, %v365
        %v368 = vmul.f32 %v363, %v366
        %369 = vrot.lane.b32.xlu0 %v320, 127
        %v370 = vpop.permute.xlu0 %369
        %371 = vrot.lane.b32.xlu0 %v321, 127
        %v372 = vpop.permute.xlu0 %371
        %vm373 = vcmp.lt.s32.totalorder %v328, 127
        %v374 = vsel %vm373, %v370, %v372
        %v375 = vsel %vm373, %v372, %v370
        %v376 = vperm.slane %v316, 5
        %v377 = vperm.slane %v317, 5
        %v378 = vmul.f32 %v374, %v376
        %v379 = vmul.f32 %v375, %v377
        %380 = vrot.lane.b32.xlu0 %v320, 113
        %v381 = vpop.permute.xlu0 %380
        %382 = vrot.lane.b32.xlu0 %v321, 113
        %v383 = vpop.permute.xlu0 %382
        %vm384 = vcmp.lt.s32.totalorder %v328, 113
        %v385 = vsel %vm384, %v381, %v383
        %v386 = vsel %vm384, %v383, %v381
        %v387 = vperm.slane %v316, 6
        %v388 = vperm.slane %v317, 6
        %v389 = vmul.f32 %v385, %v387
        %v390 = vmul.f32 %v386, %v388
        %391 = vrot.lane.b32.xlu0 %v320, 112
        %v392 = vpop.permute.xlu0 %391
        %393 = vrot.lane.b32.xlu0 %v321, 112
        %v394 = vpop.permute.xlu0 %393
        %vm395 = vcmp.lt.s32.totalorder %v328, 112
        %v396 = vsel %vm395, %v392, %v394
        %v397 = vsel %vm395, %v394, %v392
        %v398 = vperm.slane %v316, 7
        %v399 = vperm.slane %v317, 7
        %v400 = vmul.f32 %v396, %v398
        %v401 = vmul.f32 %v397, %v399
        %402 = vrot.lane.b32.xlu0 %v320, 111
        %v403 = vpop.permute.xlu0 %402
        %404 = vrot.lane.b32.xlu0 %v321, 111
        %v405 = vpop.permute.xlu0 %404
        %vm406 = vcmp.lt.s32.totalorder %v328, 111
        %v407 = vsel %vm406, %v403, %v405
        %v408 = vsel %vm406, %v405, %v403
        %v409 = vperm.slane %v318, 0
        %v410 = vperm.slane %v319, 0
        %v411 = vmul.f32 %v407, %v409
        %v412 = vmul.f32 %v408, %v410
        %vm413 = vcmask 588800
        %v415 = vsel %vm413, %v322, 0
        %417 = vmatpush.msra.mxu0 0.0
        %418 = vmatpush.msra.mxu0 0.0
        %419 = vmatpush.msra.mxu0 0.0
        %420 = vmatpush.msra.mxu0 0.0
        %421 = vmatpush.msra.mxu0 0.0
        %422 = vmatpush.msra.mxu0 0.0
        %423 = vmatpush.msra.mxu0 0.0
        %424 = vmatpush.msra.mxu0 %v411
        %425 = vmatpush.msra.mxu0 %v400
        %426 = vmatpush.msra.mxu0 %v389
        %427 = vmatpush.msra.mxu0 %v378
        %428 = vmatpush.msra.mxu0 %v320
        %429 = vmatpush.msra.mxu0 %v367
        %430 = vmatpush.msra.mxu0 %v356
        %431 = vmatpush.msra.mxu0 %v345
        %432 = vmatpush.msra.mxu0 %v334
        %433 = vmatmul.f32.gmra.mxu0 %v415
        %v434 = vpop.f32.mrf.mxu0
        %v435 = vadd.f32 0.0, %v434
        %436 = vdwg.mxu0
        %437 = vmatpush.msra.mxu0 0.0
        %438 = vmatpush.msra.mxu0 0.0
        %439 = vmatpush.msra.mxu0 0.0
        %440 = vmatpush.msra.mxu0 0.0
        %441 = vmatpush.msra.mxu0 0.0
        %442 = vmatpush.msra.mxu0 0.0
        %443 = vmatpush.msra.mxu0 0.0
        %444 = vmatpush.msra.mxu0 %v412
        %445 = vmatpush.msra.mxu0 %v401
        %446 = vmatpush.msra.mxu0 %v390
        %447 = vmatpush.msra.mxu0 %v379
        %448 = vmatpush.msra.mxu0 %v321
        %449 = vmatpush.msra.mxu0 %v368
        %450 = vmatpush.msra.mxu0 %v357
        %451 = vmatpush.msra.mxu0 %v346
        %452 = vmatpush.msra.mxu0 %v335
        %453 = vmatmul.f32.gmra.mxu0 %v415
        %v454 = vpop.f32.mrf.mxu0
        %v455 = vadd.f32 0.0, %v454
        %456 = vdwg.mxu0
        %v457 = vld [vmem:[%s3] sm:$0xff]
        %459 = vset.pattern.permute.xlu0 0
        %460 = vperm.xlu0 %459, %v457
        %v461 = vpop.permute.xlu0 %460
        %v463 = vmul.f32 %v435, %v461
        %v464 = vmul.f32 %v455, %v461
        %v465 = vld [vmem:[%s4] sm:$0xff]
        %467 = vset.pattern.permute.xlu0 0
        %468 = vperm.xlu0 %467, %v465
        %v469 = vpop.permute.xlu0 %468
        %v471 = vadd.f32 %v463, %v469
        %v472 = vadd.f32 %v464, %v469
        %v473 = vmax.f32 %v471, 0.0
        %v474 = vmax.f32 %v472, 0.0
        %v475 = vld [vmem:[%s5] sm:$0xff]
        %476 = vrot.lane.b32.xlu0 %v473, 17
        %v477 = vpop.permute.xlu0 %476
        %478 = vrot.lane.b32.xlu0 %v474, 17
        %v479 = vpop.permute.xlu0 %478
        %v480 = vsel %vm329, %v477, %v479
        %v481 = vsel %vm329, %v479, %v477
        %v482 = vmul.f32 %v481, %v332
        %v483 = vmul.f32 %v480, %v333
        %484 = vrot.lane.b32.xlu0 %v473, 16
        %v485 = vpop.permute.xlu0 %484
        %486 = vrot.lane.b32.xlu0 %v474, 16
        %v487 = vpop.permute.xlu0 %486
        %v488 = vsel %vm340, %v485, %v487
        %v489 = vsel %vm340, %v487, %v485
        %v490 = vmul.f32 %v489, %v343
        %v491 = vmul.f32 %v488, %v344
        %492 = vrot.lane.b32.xlu0 %v473, 15
        %v493 = vpop.permute.xlu0 %492
        %494 = vrot.lane.b32.xlu0 %v474, 15
        %v495 = vpop.permute.xlu0 %494
        %v496 = vsel %vm351, %v493, %v495
        %v497 = vsel %vm351, %v495, %v493
        %v498 = vmul.f32 %v497, %v354
        %v499 = vmul.f32 %v496, %v355
        %500 = vrot.lane.b32.xlu0 %v473, 1
        %v501 = vpop.permute.xlu0 %500
        %502 = vrot.lane.b32.xlu0 %v474, 1
        %v503 = vpop.permute.xlu0 %502
        %v504 = vsel %vm362, %v501, %v503
        %v505 = vsel %vm362, %v503, %v501
        %v506 = vmul.f32 %v505, %v365
        %v507 = vmul.f32 %v504, %v366
        %508 = vrot.lane.b32.xlu0 %v473, 127
        %v509 = vpop.permute.xlu0 %508
        %510 = vrot.lane.b32.xlu0 %v474, 127
        %v511 = vpop.permute.xlu0 %510
        %v512 = vsel %vm373, %v509, %v511
        %v513 = vsel %vm373, %v511, %v509
        %v514 = vmul.f32 %v512, %v376
        %v515 = vmul.f32 %v513, %v377
        %516 = vrot.lane.b32.xlu0 %v473, 113
        %v517 = vpop.permute.xlu0 %516
        %518 = vrot.lane.b32.xlu0 %v474, 113
        %v519 = vpop.permute.xlu0 %518
        %v520 = vsel %vm384, %v517, %v519
        %v521 = vsel %vm384, %v519, %v517
        %v522 = vmul.f32 %v520, %v387
        %v523 = vmul.f32 %v521, %v388
        %524 = vrot.lane.b32.xlu0 %v473, 112
        %v525 = vpop.permute.xlu0 %524
        %526 = vrot.lane.b32.xlu0 %v474, 112
        %v527 = vpop.permute.xlu0 %526
        %v528 = vsel %vm395, %v525, %v527
        %v529 = vsel %vm395, %v527, %v525
        %v530 = vmul.f32 %v528, %v398
        %v531 = vmul.f32 %v529, %v399
        %532 = vrot.lane.b32.xlu0 %v473, 111
        %v533 = vpop.permute.xlu0 %532
        %534 = vrot.lane.b32.xlu0 %v474, 111
        %v535 = vpop.permute.xlu0 %534
        %v536 = vsel %vm406, %v533, %v535
        %v537 = vsel %vm406, %v535, %v533
        %v538 = vmul.f32 %v536, %v409
        %v539 = vmul.f32 %v537, %v410
        %v540 = vld [vmem:[%s6] sm:$0xff]
        %542 = vset.pattern.permute.xlu0 0
        %543 = vperm.xlu0 %542, %v540
        %v544 = vpop.permute.xlu0 %543
        %v547 = vsel %vm413, %v475, 0
        %549 = vmatpush.msra.mxu0 0.0
        %550 = vmatpush.msra.mxu0 0.0
        %551 = vmatpush.msra.mxu0 0.0
        %552 = vmatpush.msra.mxu0 0.0
        %553 = vmatpush.msra.mxu0 0.0
        %554 = vmatpush.msra.mxu0 0.0
        %555 = vmatpush.msra.mxu0 0.0
        %556 = vmatpush.msra.mxu0 %v538
        %557 = vmatpush.msra.mxu0 %v530
        %558 = vmatpush.msra.mxu0 %v522
        %559 = vmatpush.msra.mxu0 %v514
        %560 = vmatpush.msra.mxu0 %v473
        %561 = vmatpush.msra.mxu0 %v506
        %562 = vmatpush.msra.mxu0 %v498
        %563 = vmatpush.msra.mxu0 %v490
        %564 = vmatpush.msra.mxu0 %v482
        %565 = vmatmul.f32.gmra.mxu0 %v547
        %v566 = vpop.f32.mrf.mxu0
        %v567 = vadd.f32 %v544, %v566
        %568 = vdwg.mxu0
        %569 = vmatpush.msra.mxu0 0.0
        %570 = vmatpush.msra.mxu0 0.0
        %571 = vmatpush.msra.mxu0 0.0
        %572 = vmatpush.msra.mxu0 0.0
        %573 = vmatpush.msra.mxu0 0.0
        %574 = vmatpush.msra.mxu0 0.0
        %575 = vmatpush.msra.mxu0 0.0
        %576 = vmatpush.msra.mxu0 %v539
        %577 = vmatpush.msra.mxu0 %v531
        %578 = vmatpush.msra.mxu0 %v523
        %579 = vmatpush.msra.mxu0 %v515
        %580 = vmatpush.msra.mxu0 %v474
        %581 = vmatpush.msra.mxu0 %v507
        %582 = vmatpush.msra.mxu0 %v499
        %583 = vmatpush.msra.mxu0 %v491
        %584 = vmatpush.msra.mxu0 %v483
        %585 = vmatmul.f32.gmra.mxu0 %v547
        %v586 = vpop.f32.mrf.mxu0
        %v587 = vadd.f32 %v544, %v586
        %588 = vdwg.mxu0
        %v591 = vrot.slane %v587, 4
        %vm592 = vcmask 1043456
        %v593 = vsel %vm592, %v567, %v591
        %595 = vst [vmem:[%s315] sm:$0x77] %v593
        %p596 = scmp.lt.s32.totalorder %s22, 1
        %s597 = scalar_select %p596, %s22, 1
        %s598 = smul.addr %s597, 2
        %s599 = smul.addr %s598, 4
        %s600 = scalar_lea.vmem %s7, %s599
        // Predicated region
        $region57: #{tpu_custom_call.1} parent=47 // pred_check
          %p601 = pneg %p192
        $region58: #{tpu_custom_call.1} parent=47 // pred_check_branch
          %603 = sbr.rel (%p601) target = $region60
        $region59: #{tpu_custom_call.1} parent=47 // pred_region
          _
        $region60: #{tpu_custom_call.1} parent=47 // pred_fallthru
          _
      $region48: #{tpu_custom_call.1} parent=5 // pred_fallthru
        _
      %p604 = scmp.le.s32.totalorder 2, %s17
      // Predicated region
      $region61: #{tpu_custom_call.1} parent=5 // pred_check
        %p605 = pneg %p604
      $region62: #{tpu_custom_call.1} parent=5 // pred_check_branch
        %607 = sbr.rel (%p605) target = $region64
      $region63: #{tpu_custom_call.1} parent=5 // pred_region
        %s608 = ssub.s32 %s17, 2
        // Predicated region
        $region65: #{tpu_custom_call.1} parent=63 // pred_check
          %p609 = pneg %p198
        $region66: #{tpu_custom_call.1} parent=63 // pred_check_branch
          %611 = sbr.rel (%p609) target = $region68
        $region67: #{tpu_custom_call.1} parent=63 // pred_region
          %p612 = scmp.lt.s32.totalorder %s23, 1
          %s613 = scalar_select %p612, %s23, 1
          %s614 = smul.addr %s613, 2
          %s615 = smul.addr %s614, 4
          %s616 = scalar_lea.vmem %s7, %s615
        $region68: #{tpu_custom_call.1} parent=63 // pred_fallthru
          _
      $region64: #{tpu_custom_call.1} parent=5 // pred_fallthru
        _
    $region6: #{tpu_custom_call.1} parent=1 // loop_footer
      %s21 = sadd.s32 1, %s17
    $region7: #{tpu_custom_call.1} parent=1 // loop_footer_branch
      %16 = sbr.rel target = $region3
    $region8: #{tpu_custom_call.1} parent=1 // loop_exit
      _
    %617 = vsyncpa [#allocation3], 1
    %s618 = scalar_lea.sflag [#allocation3], 1
    %619 = vsyncpa %s618, 1
    %620 = vsyncpa [#allocation5], 1

</llo_original>
